<compile_context>
chip_gen: v5e
topology: v5e:2x2
jax: 0.10.0
libtpu: 0.0.40
codegen_flags: <defaults>
</compile_context>

<pallas_src>
import functools

import jax
import jax.numpy as jnp
from jax.experimental import pallas as pl
from jax.experimental.pallas import tpu as pltpu


def _cdiv(a, b):
    return -(-a // b)


def _round_up(n, m):
    return ((n + m - 1) // m) * m


def _attention_kernel(g_ref, x_ref, wg_ref, wx_ref, bgx_ref, wp_ref, bp_ref,
                      o_ref, *, use_mxu):
    # Shapes (channels on sublanes, voxels on lanes):
    #   g_ref: (Cg, TV)     x_ref: (Cl, TV)
    #   wg_ref: (F_int, Cg) wx_ref: (F_int, Cl)  bgx_ref: (F_int, 1)
    #   wp_ref: (F_int, 1)  bp_ref: (1, 1)       o_ref:   (Cl, TV)
    g = g_ref[...].astype(jnp.float32)   # no-op cast when inputs already f32
    x = x_ref[...].astype(jnp.float32)
    wg = wg_ref[...]
    wx = wx_ref[...]

    # h = relu(Wg.g + Wx.x + (bg + bx))                       -> (F_int, TV)
    if use_mxu:
        h = (jnp.dot(wg, g, preferred_element_type=jnp.float32,
                     precision=jax.lax.Precision.HIGHEST)
             + jnp.dot(wx, x, preferred_element_type=jnp.float32,
                       precision=jax.lax.Precision.HIGHEST)
             + bgx_ref[...])
    else:
        # Tiny channel counts: keep contractions on the VPU (MXU would sit at
        # <1% utilization and add MXU push/pop to the per-tile epilogue).
        def vpu_contract(w, v):           # w: (F_int, C), v: (C, TV)
            acc = None
            for c in range(v.shape[0]):   # static, unrolled at trace time
                term = w[:, c:c + 1] * v[c:c + 1, :]
                acc = term if acc is None else acc + term
            return acc
        h = vpu_contract(wg, g) + vpu_contract(wx, x) + bgx_ref[...]

    h = jnp.maximum(h, 0.0)

    # psi = sigmoid(Wp.h + bp)                                -> (1, TV)
    # Tiny contraction (K = F_int): VPU multiply + sublane reduce, no MXU.
    p = jnp.sum(wp_ref[...] * h, axis=0, keepdims=True) + bp_ref[...]
    a = jax.nn.sigmoid(p)

    # out = x * psi  (psi broadcast across channel sublanes)
    o_ref[...] = (x * a).astype(o_ref.dtype)


def _fold_bn(w, b, gamma, beta, mean, var, eps=1e-5):
    """Fold eval-mode BatchNorm into a (Cin, Cout) weight and (Cout,) bias."""
    scale = gamma / jnp.sqrt(var + eps)            # (Cout,)
    w_eff = w * scale[None, :]                     # (Cin, Cout)
    b_eff = (b - mean) * scale + beta              # (Cout,)
    return w_eff, b_eff


@functools.partial(jax.jit,
                   static_argnames=("tv", "n_vt", "vmem_limit", "use_mxu"))
def _forward(g, x, params, *, tv, n_vt, vmem_limit, use_mxu):
    N, Cg, D, H, W = g.shape
    Cl = x.shape[1]
    V = D * H * W

    # Fold eval-mode BN into the 1x1x1 convs; transpose to (Cout, Cin) so the
    # in-kernel contraction is (F_int, C) @ (C, TV).
    wg, bg = _fold_bn(params["wg"], params["bg"], params["bn_g_gamma"],
                      params["bn_g_beta"], params["bn_g_mean"], params["bn_g_var"])
    wx, bx = _fold_bn(params["wx"], params["bx"], params["bn_x_gamma"],
                      params["bn_x_beta"], params["bn_x_mean"], params["bn_x_var"])
    wp, bp = _fold_bn(params["wp"], params["bp"], params["bn_p_gamma"],
                      params["bn_p_beta"], params["bn_p_mean"], params["bn_p_var"])

    F_int = wg.shape[1]
    wgT = wg.T.astype(jnp.float32)                          # (F_int, Cg)
    wxT = wx.T.astype(jnp.float32)                          # (F_int, Cl)
    bgx = (bg + bx).reshape(F_int, 1).astype(jnp.float32)   # folded bias
    wp2 = wp.reshape(F_int, 1).astype(jnp.float32)          # (F_int, 1)
    bp2 = bp.reshape(1, 1).astype(jnp.float32)              # (1, 1)

    # Native NCDHW layout -> (N, C, V): a free reshape (no pad, no transpose,
    # no extra HBM round-trip).
    g3 = g.reshape(N, Cg, V)
    x3 = x.reshape(N, Cl, V)

    itemsize = jnp.dtype(x.dtype).itemsize
    cost = pl.CostEstimate(
        flops=int(2 * N * V * (F_int * (Cg + Cl + 1) + Cl + 1)),
        transcendentals=int(N * V),
        bytes_accessed=int(itemsize * N * V * (Cg + 2 * Cl)),
    )

    const = lambda n, v: (0, 0)   # small weights/biases stay resident
    kernel = functools.partial(_attention_kernel, use_mxu=use_mxu)

    out3 = pl.pallas_call(
        kernel,
        out_shape=jax.ShapeDtypeStruct((N, Cl, V), x.dtype),
        grid=(N, n_vt),
        in_specs=[
            pl.BlockSpec((None, Cg, tv), lambda n, v: (n, 0, v)),   # g tile
            pl.BlockSpec((None, Cl, tv), lambda n, v: (n, 0, v)),   # x tile
            pl.BlockSpec((F_int, Cg), const),                       # Wg^T
            pl.BlockSpec((F_int, Cl), const),                       # Wx^T
            pl.BlockSpec((F_int, 1), const),                        # bg + bx
            pl.BlockSpec((F_int, 1), const),                        # W_psi
            pl.BlockSpec((1, 1), const),                            # b_psi
        ],
        out_specs=pl.BlockSpec((None, Cl, tv), lambda n, v: (n, 0, v)),
        compiler_params=pltpu.CompilerParams(
            dimension_semantics=("parallel", "parallel"),
            vmem_limit_bytes=vmem_limit),
        cost_estimate=cost,
    )(g3, x3, wgT, wxT, bgx, wp2, bp2)

    return out3.reshape(N, Cl, D, H, W)


def attention_block_simple(g, x, params):
    """g: (N, F_g, D, H, W), x: (N, F_l, D, H, W) -> (N, F_l, D, H, W)."""
    N, Cg, D, H, W = g.shape
    Cl = x.shape[1]
    F_int = params["wg"].shape[1]
    V = D * H * W
    itemsize = jnp.dtype(x.dtype).itemsize

    # Per-chip VMEM capacity (128 MiB on v5e/v6e, 64 MiB per TC on v7x).
    try:
        vmem_cap = int(pltpu.get_tpu_info().vmem_capacity_bytes)
    except Exception:
        vmem_cap = 64 * 1024 * 1024
    budget = int(vmem_cap * 0.70)          # leave headroom for the compiler

    # VMEM bytes per voxel lane: double-buffered g/x/out streams plus the
    # (F_int, TV) intermediate and the psi rows.
    per_voxel = 2 * itemsize * (Cg + 2 * Cl) + 4 * (F_int + 2)
    tv = (budget // per_voxel // 128) * 128
    tv = max(128, min(tv, _round_up(V, 128)))
    n_vt = _cdiv(V, tv)

    # v7x megacore: keep >= 2 grid steps along a parallel axis so both
    # TensorCores get work (near-zero impact on single-TC v5e/v6e).
    if N * n_vt < 2 and V > 128:
        tv = max(128, _round_up(_cdiv(V, 2), 128))
        n_vt = _cdiv(V, tv)

    # Tiny channel counts -> VPU FMAs; realistic channel counts -> MXU dots.
    use_mxu = (Cg >= 32 or Cl >= 32 or F_int >= 64)
    vmem_limit = min(budget, vmem_cap)

    return _forward(g, x, params, tv=int(tv), n_vt=int(n_vt),
                    vmem_limit=int(vmem_limit), use_mxu=bool(use_mxu))


def _ref_forward(g, x, params):
    """Pure-JAX reference of the folded forward pass (eval-mode BN)."""
    N, Cg, D, H, W = g.shape
    Cl = x.shape[1]
    V = D * H * W
    wg, bg = _fold_bn(params["wg"], params["bg"], params["bn_g_gamma"],
                      params["bn_g_beta"], params["bn_g_mean"], params["bn_g_var"])
    wx, bx = _fold_bn(params["wx"], params["bx"], params["bn_x_gamma"],
                      params["bn_x_beta"], params["bn_x_mean"], params["bn_x_var"])
    wp, bp = _fold_bn(params["wp"], params["bp"], params["bn_p_gamma"],
                      params["bn_p_beta"], params["bn_p_mean"], params["bn_p_var"])
    hi = jax.lax.Precision.HIGHEST
    g3 = g.reshape(N, Cg, V).astype(jnp.float32)
    x3 = x.reshape(N, Cl, V).astype(jnp.float32)
    g1 = jnp.einsum("cf,ncv->nfv", wg, g3, precision=hi) + bg[None, :, None]
    x1 = jnp.einsum("cf,ncv->nfv", wx, x3, precision=hi) + bx[None, :, None]
    h = jnp.maximum(g1 + x1, 0.0)
    p = jnp.einsum("fo,nfv->nov", wp, h, precision=hi) + bp[None, :, None]
    a = jax.nn.sigmoid(p)
    out = (x3 * a).astype(x.dtype)
    return out.reshape(N, Cl, D, H, W)


def _init_params(key, F_g, F_l, F_int, dtype=jnp.float32):
    ks = jax.random.split(key, 18)
    return {
        # 1x1x1 Conv3d weights stored as (Cin, Cout) channel matmuls.
        "wg": jax.random.normal(ks[0], (F_g, F_int), dtype) * 0.2,
        "bg": jax.random.normal(ks[1], (F_int,), dtype) * 0.1,
        "wx": jax.random.normal(ks[2], (F_l, F_int), dtype) * 0.2,
        "bx": jax.random.normal(ks[3], (F_int,), dtype) * 0.1,
        "wp": jax.random.normal(ks[4], (F_int, 1), dtype) * 0.2,
        "bp": jax.random.normal(ks[5], (1,), dtype) * 0.1,
        # BatchNorm3d params (eval mode running stats).
        "bn_g_gamma": 1.0 + 0.1 * jax.random.normal(ks[6], (F_int,), dtype),
        "bn_g_beta": 0.1 * jax.random.normal(ks[7], (F_int,), dtype),
        "bn_g_mean": 0.05 * jax.random.normal(ks[8], (F_int,), dtype),
        "bn_g_var": jnp.ones((F_int,), dtype) + 0.1 * jax.random.uniform(ks[9], (F_int,), dtype),
        "bn_x_gamma": 1.0 + 0.1 * jax.random.normal(ks[10], (F_int,), dtype),
        "bn_x_beta": 0.1 * jax.random.normal(ks[11], (F_int,), dtype),
        "bn_x_mean": 0.05 * jax.random.normal(ks[12], (F_int,), dtype),
        "bn_x_var": jnp.ones((F_int,), dtype) + 0.1 * jax.random.uniform(ks[13], (F_int,), dtype),
        "bn_p_gamma": 1.0 + 0.1 * jax.random.normal(ks[14], (1,), dtype),
        "bn_p_beta": 0.1 * jax.random.normal(ks[15], (1,), dtype),
        "bn_p_mean": 0.05 * jax.random.normal(ks[16], (1,), dtype),
        "bn_p_var": jnp.ones((1,), dtype) + 0.1 * jax.random.uniform(ks[17], (1,), dtype),
    }


if __name__ == "__main__":
    key = jax.random.PRNGKey(0)
    F_g, F_l, F_int = 4, 4, 8
    N, D, H, W = 2, 8, 8, 8            # V = D*H*W = 512 voxels per batch item

    kp, kg, kx = jax.random.split(key, 3)
    params = _init_params(kp, F_g, F_l, F_int)
    g = jax.random.normal(kg, (N, F_g, D, H, W), jnp.float32)
    x = jax.random.normal(kx, (N, F_l, D, H, W), jnp.float32)

    out = attention_block_simple(g, x, params)
    out = jax.block_until_ready(out)

    ref = _ref_forward(g, x, params)
    assert out.shape == x.shape
    assert jnp.allclose(out, ref, atol=1e-4, rtol=1e-4), "mismatch vs reference"
    print("KERNEL_OK")
</pallas_src>

<mosaic_0001>
module attributes {stable_mosaic.version = 11 : i64} {
  func.func @_attention_kernel(%arg0: i32, %arg1: i32, %arg2: memref<1x4x512xf32, #tpu.memory_space<vmem>>, %arg3: memref<1x4x512xf32, #tpu.memory_space<vmem>>, %arg4: memref<8x4xf32, #tpu.memory_space<vmem>>, %arg5: memref<8x4xf32, #tpu.memory_space<vmem>>, %arg6: memref<8x1xf32, #tpu.memory_space<vmem>>, %arg7: memref<8x1xf32, #tpu.memory_space<vmem>>, %arg8: memref<1x1xf32, #tpu.memory_space<vmem>>, %arg9: memref<1x4x512xf32, #tpu.memory_space<vmem>>) attributes {dimension_semantics = [#tpu.dimension_semantics<parallel>, #tpu.dimension_semantics<parallel>], iteration_bounds = array<i64: 2, 1>, scalar_prefetch = 0 : i64, scratch_operands = 0 : i64, tpu.core_type = #tpu.core_type<tc>, window_params = [{transform_indices = @transform_0, window_bounds = array<i64: 1, 4, 512>}, {transform_indices = @transform_1, window_bounds = array<i64: 1, 4, 512>}, {pipeline_mode = #tpu.pipeline_mode<synchronous>, transform_indices = @transform_2, window_bounds = array<i64: 8, 4>}, {pipeline_mode = #tpu.pipeline_mode<synchronous>, transform_indices = @transform_3, window_bounds = array<i64: 8, 4>}, {pipeline_mode = #tpu.pipeline_mode<synchronous>, transform_indices = @transform_4, window_bounds = array<i64: 8, 1>}, {pipeline_mode = #tpu.pipeline_mode<synchronous>, transform_indices = @transform_5, window_bounds = array<i64: 8, 1>}, {pipeline_mode = #tpu.pipeline_mode<synchronous>, transform_indices = @transform_6, window_bounds = array<i64: 1, 1>}, {transform_indices = @transform_7, window_bounds = array<i64: 1, 4, 512>}]} {
    %c0 = arith.constant 0 : index
    %c0_0 = arith.constant 0 : index
    %c0_1 = arith.constant 0 : index
    %0 = vector.load %arg2[%c0, %c0_0, %c0_1] : memref<1x4x512xf32, #tpu.memory_space<vmem>>, vector<1x4x512xf32>
    %1 = vector.shape_cast %0 : vector<1x4x512xf32> to vector<4x512xf32>
    %c0_2 = arith.constant 0 : index
    %c0_3 = arith.constant 0 : index
    %c0_4 = arith.constant 0 : index
    %2 = vector.load %arg3[%c0_2, %c0_3, %c0_4] : memref<1x4x512xf32, #tpu.memory_space<vmem>>, vector<1x4x512xf32>
    %3 = vector.shape_cast %2 : vector<1x4x512xf32> to vector<4x512xf32>
    %c0_5 = arith.constant 0 : index
    %c0_6 = arith.constant 0 : index
    %4 = vector.load %arg4[%c0_5, %c0_6] : memref<8x4xf32, #tpu.memory_space<vmem>>, vector<8x4xf32>
    %c0_7 = arith.constant 0 : index
    %c0_8 = arith.constant 0 : index
    %5 = vector.load %arg5[%c0_7, %c0_8] : memref<8x4xf32, #tpu.memory_space<vmem>>, vector<8x4xf32>
    %6 = vector.extract_strided_slice %4 {offsets = [0, 0], sizes = [8, 1], strides = [1, 1]} : vector<8x4xf32> to vector<8x1xf32>
    %7 = vector.extract_strided_slice %1 {offsets = [0, 0], sizes = [1, 512], strides = [1, 1]} : vector<4x512xf32> to vector<1x512xf32>
    %8 = vector.broadcast %6 : vector<8x1xf32> to vector<8x512xf32>
    %9 = vector.broadcast %7 : vector<1x512xf32> to vector<8x512xf32>
    %10 = arith.mulf %8, %9 : vector<8x512xf32>
    %11 = vector.extract_strided_slice %4 {offsets = [0, 1], sizes = [8, 1], strides = [1, 1]} : vector<8x4xf32> to vector<8x1xf32>
    %12 = vector.extract_strided_slice %1 {offsets = [1, 0], sizes = [1, 512], strides = [1, 1]} : vector<4x512xf32> to vector<1x512xf32>
    %13 = vector.broadcast %11 : vector<8x1xf32> to vector<8x512xf32>
    %14 = vector.broadcast %12 : vector<1x512xf32> to vector<8x512xf32>
    %15 = arith.mulf %13, %14 : vector<8x512xf32>
    %16 = arith.addf %10, %15 : vector<8x512xf32>
    %17 = vector.extract_strided_slice %4 {offsets = [0, 2], sizes = [8, 1], strides = [1, 1]} : vector<8x4xf32> to vector<8x1xf32>
    %18 = vector.extract_strided_slice %1 {offsets = [2, 0], sizes = [1, 512], strides = [1, 1]} : vector<4x512xf32> to vector<1x512xf32>
    %19 = vector.broadcast %17 : vector<8x1xf32> to vector<8x512xf32>
    %20 = vector.broadcast %18 : vector<1x512xf32> to vector<8x512xf32>
    %21 = arith.mulf %19, %20 : vector<8x512xf32>
    %22 = arith.addf %16, %21 : vector<8x512xf32>
    %23 = vector.extract_strided_slice %4 {offsets = [0, 3], sizes = [8, 1], strides = [1, 1]} : vector<8x4xf32> to vector<8x1xf32>
    %24 = vector.extract_strided_slice %1 {offsets = [3, 0], sizes = [1, 512], strides = [1, 1]} : vector<4x512xf32> to vector<1x512xf32>
    %25 = vector.broadcast %23 : vector<8x1xf32> to vector<8x512xf32>
    %26 = vector.broadcast %24 : vector<1x512xf32> to vector<8x512xf32>
    %27 = arith.mulf %25, %26 : vector<8x512xf32>
    %28 = arith.addf %22, %27 : vector<8x512xf32>
    %29 = vector.extract_strided_slice %5 {offsets = [0, 0], sizes = [8, 1], strides = [1, 1]} : vector<8x4xf32> to vector<8x1xf32>
    %30 = vector.extract_strided_slice %3 {offsets = [0, 0], sizes = [1, 512], strides = [1, 1]} : vector<4x512xf32> to vector<1x512xf32>
    %31 = vector.broadcast %29 : vector<8x1xf32> to vector<8x512xf32>
    %32 = vector.broadcast %30 : vector<1x512xf32> to vector<8x512xf32>
    %33 = arith.mulf %31, %32 : vector<8x512xf32>
    %34 = vector.extract_strided_slice %5 {offsets = [0, 1], sizes = [8, 1], strides = [1, 1]} : vector<8x4xf32> to vector<8x1xf32>
    %35 = vector.extract_strided_slice %3 {offsets = [1, 0], sizes = [1, 512], strides = [1, 1]} : vector<4x512xf32> to vector<1x512xf32>
    %36 = vector.broadcast %34 : vector<8x1xf32> to vector<8x512xf32>
    %37 = vector.broadcast %35 : vector<1x512xf32> to vector<8x512xf32>
    %38 = arith.mulf %36, %37 : vector<8x512xf32>
    %39 = arith.addf %33, %38 : vector<8x512xf32>
    %40 = vector.extract_strided_slice %5 {offsets = [0, 2], sizes = [8, 1], strides = [1, 1]} : vector<8x4xf32> to vector<8x1xf32>
    %41 = vector.extract_strided_slice %3 {offsets = [2, 0], sizes = [1, 512], strides = [1, 1]} : vector<4x512xf32> to vector<1x512xf32>
    %42 = vector.broadcast %40 : vector<8x1xf32> to vector<8x512xf32>
    %43 = vector.broadcast %41 : vector<1x512xf32> to vector<8x512xf32>
    %44 = arith.mulf %42, %43 : vector<8x512xf32>
    %45 = arith.addf %39, %44 : vector<8x512xf32>
    %46 = vector.extract_strided_slice %5 {offsets = [0, 3], sizes = [8, 1], strides = [1, 1]} : vector<8x4xf32> to vector<8x1xf32>
    %47 = vector.extract_strided_slice %3 {offsets = [3, 0], sizes = [1, 512], strides = [1, 1]} : vector<4x512xf32> to vector<1x512xf32>
    %48 = vector.broadcast %46 : vector<8x1xf32> to vector<8x512xf32>
    %49 = vector.broadcast %47 : vector<1x512xf32> to vector<8x512xf32>
    %50 = arith.mulf %48, %49 : vector<8x512xf32>
    %51 = arith.addf %45, %50 : vector<8x512xf32>
    %52 = arith.addf %28, %51 : vector<8x512xf32>
    %c0_9 = arith.constant 0 : index
    %c0_10 = arith.constant 0 : index
    %53 = vector.load %arg6[%c0_9, %c0_10] : memref<8x1xf32, #tpu.memory_space<vmem>>, vector<8x1xf32>
    %54 = vector.broadcast %53 : vector<8x1xf32> to vector<8x512xf32>
    %55 = arith.addf %52, %54 : vector<8x512xf32>
    %cst = arith.constant 0.000000e+00 : f32
    %56 = vector.broadcast %cst : f32 to vector<8x512xf32>
    %57 = arith.maximumf %55, %56 : vector<8x512xf32>
    %c0_11 = arith.constant 0 : index
    %c0_12 = arith.constant 0 : index
    %58 = vector.load %arg7[%c0_11, %c0_12] : memref<8x1xf32, #tpu.memory_space<vmem>>, vector<8x1xf32>
    %59 = vector.broadcast %58 : vector<8x1xf32> to vector<8x512xf32>
    %60 = arith.mulf %59, %57 : vector<8x512xf32>
    %cst_13 = arith.constant dense<0.000000e+00> : vector<512xf32>
    %61 = vector.multi_reduction <add>, %60, %cst_13 [0] : vector<8x512xf32> to vector<512xf32>
    %62 = vector.shape_cast %61 : vector<512xf32> to vector<1x512xf32>
    %c0_14 = arith.constant 0 : index
    %c0_15 = arith.constant 0 : index
    %63 = vector.load %arg8[%c0_14, %c0_15] : memref<1x1xf32, #tpu.memory_space<vmem>>, vector<1x1xf32>
    %64 = vector.broadcast %63 : vector<1x1xf32> to vector<1x512xf32>
    %65 = arith.addf %62, %64 : vector<1x512xf32>
    %66 = arith.negf %65 : vector<1x512xf32>
    %67 = math.exp %66 : vector<1x512xf32>
    %cst_16 = arith.constant 1.000000e+00 : f32
    %68 = vector.broadcast %cst_16 : f32 to vector<1x512xf32>
    %69 = arith.addf %68, %67 : vector<1x512xf32>
    %70 = arith.divf %68, %69 : vector<1x512xf32>
    %71 = vector.broadcast %70 : vector<1x512xf32> to vector<4x512xf32>
    %72 = arith.mulf %3, %71 : vector<4x512xf32>
    %c0_17 = arith.constant 0 : index
    %c0_18 = arith.constant 0 : index
    %c0_19 = arith.constant 0 : index
    %73 = vector.load %arg9[%c0_17, %c0_18, %c0_19] : memref<1x4x512xf32, #tpu.memory_space<vmem>>, vector<1x4x512xf32>
    %74 = vector.shape_cast %73 : vector<1x4x512xf32> to vector<4x512xf32>
    %75 = vector.shape_cast %72 : vector<4x512xf32> to vector<1x4x512xf32>
    tpu.vector_store %arg9[%c0_17, %c0_18, %c0_19], %75 {strides = array<i32>} : memref<1x4x512xf32, #tpu.memory_space<vmem>>, vector<1x4x512xf32>,
    return
  }
  func.func @transform_0(%arg0: i32, %arg1: i32) -> (i32, i32, i32) {
    %c0_i32 = arith.constant 0 : i32
    %c0_i32_0 = arith.constant 0 : i32
    return %arg0, %c0_i32, %arg1 : i32, i32, i32
  }
  func.func @transform_1(%arg0: i32, %arg1: i32) -> (i32, i32, i32) {
    %c0_i32 = arith.constant 0 : i32
    %c0_i32_0 = arith.constant 0 : i32
    return %arg0, %c0_i32, %arg1 : i32, i32, i32
  }
  func.func @transform_2(%arg0: i32, %arg1: i32) -> (i32, i32) {
    %c0_i32 = arith.constant 0 : i32
    %c0_i32_0 = arith.constant 0 : i32
    %c0_i32_1 = arith.constant 0 : i32
    return %c0_i32, %c0_i32_0 : i32, i32
  }
  func.func @transform_3(%arg0: i32, %arg1: i32) -> (i32, i32) {
    %c0_i32 = arith.constant 0 : i32
    %c0_i32_0 = arith.constant 0 : i32
    %c0_i32_1 = arith.constant 0 : i32
    return %c0_i32, %c0_i32_0 : i32, i32
  }
  func.func @transform_4(%arg0: i32, %arg1: i32) -> (i32, i32) {
    %c0_i32 = arith.constant 0 : i32
    %c0_i32_0 = arith.constant 0 : i32
    %c0_i32_1 = arith.constant 0 : i32
    return %c0_i32, %c0_i32_0 : i32, i32
  }
  func.func @transform_5(%arg0: i32, %arg1: i32) -> (i32, i32) {
    %c0_i32 = arith.constant 0 : i32
    %c0_i32_0 = arith.constant 0 : i32
    %c0_i32_1 = arith.constant 0 : i32
    return %c0_i32, %c0_i32_0 : i32, i32
  }
  func.func @transform_6(%arg0: i32, %arg1: i32) -> (i32, i32) {
    %c0_i32 = arith.constant 0 : i32
    %c0_i32_0 = arith.constant 0 : i32
    %c0_i32_1 = arith.constant 0 : i32
    return %c0_i32, %c0_i32_0 : i32, i32
  }
  func.func @transform_7(%arg0: i32, %arg1: i32) -> (i32, i32, i32) {
    %c0_i32 = arith.constant 0 : i32
    %c0_i32_0 = arith.constant 0 : i32
    return %arg0, %c0_i32, %arg1 : i32, i32, i32
  }
}

</mosaic_0001>

<llo_original>
// kernel: _forward.1
$region0: #{_forward.1}
  #allocation0 [shape = 'u32[]', space=smem, size = 0x4, offset = 0x4, fixed_abs, tag = 'smem constant byte address 0x4 - core index']
  #allocation1 [shape = 'u32[72,128]{1,0:T(1,128)}', space=vmem, size = 0x9000, scoped, tag = 'internal scratch']
  #allocation2 [shape = 'f32[1,1]{1,0:T(1,128)S(1)}', space=vmem, size = 0x200, scoped, tag = 'scoped memory for _forward.1']
  %s0 = inlined_call_operand.vmem [shape: f32[2,4,512], index: 0, kind: input, shape index: {}]
  %s1 = inlined_call_operand.vmem [shape: f32[2,4,512], index: 1, kind: input, shape index: {}]
  %s2 = inlined_call_operand.vmem [shape: f32[8,4], index: 2, kind: input, shape index: {}]
  %s3 = inlined_call_operand.vmem [shape: f32[8,4], index: 3, kind: input, shape index: {}]
  %s4 = inlined_call_operand.vmem [shape: f32[8,1], index: 4, kind: input, shape index: {}]
  %s5 = inlined_call_operand.vmem [shape: f32[8,1], index: 5, kind: input, shape index: {}]
  %s6 = inlined_call_operand.<no memory space> [shape: f32[1,1], index: 6, kind: input, shape index: {}]
  %s7 = inlined_call_operand.vmem [shape: f32[2,4,512], index: 7, kind: output, shape index: {}]
  %s8 = sld [smem:[#allocation0]]
  $region61: #{_forward.1} parent=0
    _
  %s10 = ssub.s32 1, %s8
  %s11 = scalar_select 0, %s10, %s8
  %v12 = vstv %s6
  %13 = vst [vmem:[#allocation2] sm:$0x1] %v12
  loop: start=0, step=1, limit=4
  $region2: #{_forward.1} parent=0 // loop_pre_header
    _
  $region3: #{_forward.1} parent=0 // loop_header
    %s15 = sphi 0, %s19
    %p16 = scmp.ge.s32.totalorder %s15, 4
    %s22 = sphi 0, %s34
    %s23 = sphi 0, %s30
    %s24 = sphi 0, %s22
    %s25 = sphi 0, %s23
    %s26 = sphi 0, %s24
    %s27 = sphi 0, %s25
    %s39 = sphi 0, %s41
    %s42 = sphi 0, %s39
    %s43 = sphi 0, %s42
    %s59 = sphi 0, %s43
    %s67 = sphi 0, %s69
    %s70 = sphi 0, %s67
    %s71 = sphi 0, %s70
    %s87 = sphi 0, %s71
    %s91 = sphi 0, %s91
    %s93 = sphi 0, %s91
    %s94 = sphi 0, %s93
    %s108 = sphi 0, %s94
    %s112 = sphi 0, %s112
    %s114 = sphi 0, %s112
    %s115 = sphi 0, %s114
    %s129 = sphi 0, %s115
    %s133 = sphi 0, %s133
    %s135 = sphi 0, %s133
    %s136 = sphi 0, %s135
    %s150 = sphi 0, %s136
    %s154 = sphi 0, %s154
    %s156 = sphi 0, %s154
    %s157 = sphi 0, %s156
    %s171 = sphi 0, %s157
    %s175 = sphi 0, %s175
    %s177 = sphi 0, %s175
    %s178 = sphi 0, %s177
    %s192 = sphi 0, %s178
    %s200 = sphi 0, %s202
    %s203 = sphi 0, %s200
    %s204 = sphi 0, %s203
    %s220 = sphi 0, %s204
  $region4: #{_forward.1} parent=0 // loop_header_branch
    %18 = sbr.rel (%p16) target = $region8
  $region5: #{_forward.1} parent=0 // loop_body
    %s20 = ssub.s32 %s15, 1
    %s21 = ssub.s32 %s15, 2
    %s28 = sadd.s32 1, %s23
    %p29 = scmp.ge.s32.totalorder %s28, 1
    %s30 = scalar_select %p29, 0, %s28
    %s31 = sadd.s32 1, %s22
    %s32 = scalar_select %p29, %s31, %s22
    %p33 = scmp.ge.s32.totalorder %s32, 2
    %s34 = scalar_select %p33, 0, %s32
    %s35 = ssub.s32 %s22, %s34
    %s36 = ssub.s32 %s23, %s30
    %s37 = sor.u32 %s35, %s36
    %p38 = scmp.eq.s32.totalorder %s37, 0
    %s40 = sadd.s32 %s39, 1
    %s41 = scalar_select %p38, %s39, %s40
    %p44 = pneg %p38
    %p45 = scmp.eq.s32.totalorder %s15, 1
    %p46 = por %p44, %p45
    %p47 = scmp.ne.s32.totalorder %s39, %s42
    %p48 = scmp.eq.s32.totalorder %s15, 0
    %p49 = por %p47, %p48
    %p50 = scmp.ne.s32.totalorder %s39, %s42
    %p51 = scmp.eq.s32.totalorder %s20, 1
    %p52 = por %p50, %p51
    %p53 = scmp.ne.s32.totalorder %s42, %s43
    %p54 = scmp.eq.s32.totalorder %s20, 0
    %p55 = por %p53, %p54
    %p56 = scmp.ne.s32.totalorder %s42, %s43
    %p57 = scmp.eq.s32.totalorder %s21, 1
    %p58 = por %p56, %p57
    %p60 = scmp.ne.s32.totalorder %s43, %s59
    %p61 = scmp.eq.s32.totalorder %s21, 0
    %p62 = por %p60, %p61
    %s63 = ssub.s32 %s22, %s34
    %s64 = ssub.s32 %s23, %s30
    %s65 = sor.u32 %s63, %s64
    %p66 = scmp.eq.s32.totalorder %s65, 0
    %s68 = sadd.s32 %s67, 1
    %s69 = scalar_select %p66, %s67, %s68
    %p72 = pneg %p66
    %p73 = scmp.eq.s32.totalorder %s15, 1
    %p74 = por %p72, %p73
    %p75 = scmp.ne.s32.totalorder %s67, %s70
    %p76 = scmp.eq.s32.totalorder %s15, 0
    %p77 = por %p75, %p76
    %p78 = scmp.ne.s32.totalorder %s67, %s70
    %p79 = scmp.eq.s32.totalorder %s20, 1
    %p80 = por %p78, %p79
    %p81 = scmp.ne.s32.totalorder %s70, %s71
    %p82 = scmp.eq.s32.totalorder %s20, 0
    %p83 = por %p81, %p82
    %p84 = scmp.ne.s32.totalorder %s70, %s71
    %p85 = scmp.eq.s32.totalorder %s21, 1
    %p86 = por %p84, %p85
    %p88 = scmp.ne.s32.totalorder %s71, %s87
    %p89 = scmp.eq.s32.totalorder %s21, 0
    %p90 = por %p88, %p89
    %s92 = sadd.s32 %s91, 1
    %p95 = scmp.eq.s32.totalorder %s15, 1
    %p96 = scmp.ne.s32.totalorder %s91, %s93
    %p97 = scmp.eq.s32.totalorder %s15, 0
    %p98 = por %p96, %p97
    %p99 = scmp.ne.s32.totalorder %s91, %s93
    %p100 = scmp.eq.s32.totalorder %s20, 1
    %p101 = por %p99, %p100
    %p102 = scmp.ne.s32.totalorder %s93, %s94
    %p103 = scmp.eq.s32.totalorder %s20, 0
    %p104 = por %p102, %p103
    %p105 = scmp.ne.s32.totalorder %s93, %s94
    %p106 = scmp.eq.s32.totalorder %s21, 1
    %p107 = por %p105, %p106
    %p109 = scmp.ne.s32.totalorder %s94, %s108
    %p110 = scmp.eq.s32.totalorder %s21, 0
    %p111 = por %p109, %p110
    %s113 = sadd.s32 %s112, 1
    %p116 = scmp.eq.s32.totalorder %s15, 1
    %p117 = scmp.ne.s32.totalorder %s112, %s114
    %p118 = scmp.eq.s32.totalorder %s15, 0
    %p119 = por %p117, %p118
    %p120 = scmp.ne.s32.totalorder %s112, %s114
    %p121 = scmp.eq.s32.totalorder %s20, 1
    %p122 = por %p120, %p121
    %p123 = scmp.ne.s32.totalorder %s114, %s115
    %p124 = scmp.eq.s32.totalorder %s20, 0
    %p125 = por %p123, %p124
    %p126 = scmp.ne.s32.totalorder %s114, %s115
    %p127 = scmp.eq.s32.totalorder %s21, 1
    %p128 = por %p126, %p127
    %p130 = scmp.ne.s32.totalorder %s115, %s129
    %p131 = scmp.eq.s32.totalorder %s21, 0
    %p132 = por %p130, %p131
    %s134 = sadd.s32 %s133, 1
    %p137 = scmp.eq.s32.totalorder %s15, 1
    %p138 = scmp.ne.s32.totalorder %s133, %s135
    %p139 = scmp.eq.s32.totalorder %s15, 0
    %p140 = por %p138, %p139
    %p141 = scmp.ne.s32.totalorder %s133, %s135
    %p142 = scmp.eq.s32.totalorder %s20, 1
    %p143 = por %p141, %p142
    %p144 = scmp.ne.s32.totalorder %s135, %s136
    %p145 = scmp.eq.s32.totalorder %s20, 0
    %p146 = por %p144, %p145
    %p147 = scmp.ne.s32.totalorder %s135, %s136
    %p148 = scmp.eq.s32.totalorder %s21, 1
    %p149 = por %p147, %p148
    %p151 = scmp.ne.s32.totalorder %s136, %s150
    %p152 = scmp.eq.s32.totalorder %s21, 0
    %p153 = por %p151, %p152
    %s155 = sadd.s32 %s154, 1
    %p158 = scmp.eq.s32.totalorder %s15, 1
    %p159 = scmp.ne.s32.totalorder %s154, %s156
    %p160 = scmp.eq.s32.totalorder %s15, 0
    %p161 = por %p159, %p160
    %p162 = scmp.ne.s32.totalorder %s154, %s156
    %p163 = scmp.eq.s32.totalorder %s20, 1
    %p164 = por %p162, %p163
    %p165 = scmp.ne.s32.totalorder %s156, %s157
    %p166 = scmp.eq.s32.totalorder %s20, 0
    %p167 = por %p165, %p166
    %p168 = scmp.ne.s32.totalorder %s156, %s157
    %p169 = scmp.eq.s32.totalorder %s21, 1
    %p170 = por %p168, %p169
    %p172 = scmp.ne.s32.totalorder %s157, %s171
    %p173 = scmp.eq.s32.totalorder %s21, 0
    %p174 = por %p172, %p173
    %s176 = sadd.s32 %s175, 1
    %p179 = scmp.eq.s32.totalorder %s15, 1
    %p180 = scmp.ne.s32.totalorder %s175, %s177
    %p181 = scmp.eq.s32.totalorder %s15, 0
    %p182 = por %p180, %p181
    %p183 = scmp.ne.s32.totalorder %s175, %s177
    %p184 = scmp.eq.s32.totalorder %s20, 1
    %p185 = por %p183, %p184
    %p186 = scmp.ne.s32.totalorder %s177, %s178
    %p187 = scmp.eq.s32.totalorder %s20, 0
    %p188 = por %p186, %p187
    %p189 = scmp.ne.s32.totalorder %s177, %s178
    %p190 = scmp.eq.s32.totalorder %s21, 1
    %p191 = por %p189, %p190
    %p193 = scmp.ne.s32.totalorder %s178, %s192
    %p194 = scmp.eq.s32.totalorder %s21, 0
    %p195 = por %p193, %p194
    %s196 = ssub.s32 %s22, %s34
    %s197 = ssub.s32 %s23, %s30
    %s198 = sor.u32 %s196, %s197
    %p199 = scmp.eq.s32.totalorder %s198, 0
    %s201 = sadd.s32 %s200, 1
    %s202 = scalar_select %p199, %s200, %s201
    %p205 = pneg %p199
    %p206 = scmp.eq.s32.totalorder %s15, 1
    %p207 = por %p205, %p206
    %p208 = scmp.ne.s32.totalorder %s200, %s203
    %p209 = scmp.eq.s32.totalorder %s15, 0
    %p210 = por %p208, %p209
    %p211 = scmp.ne.s32.totalorder %s200, %s203
    %p212 = scmp.eq.s32.totalorder %s20, 1
    %p213 = por %p211, %p212
    %p214 = scmp.ne.s32.totalorder %s203, %s204
    %p215 = scmp.eq.s32.totalorder %s20, 0
    %p216 = por %p214, %p215
    %p217 = scmp.ne.s32.totalorder %s203, %s204
    %p218 = scmp.eq.s32.totalorder %s21, 1
    %p219 = por %p217, %p218
    %p221 = scmp.ne.s32.totalorder %s204, %s220
    %p222 = scmp.eq.s32.totalorder %s21, 0
    %p223 = por %p221, %p222
    %p224 = scmp.le.s32.totalorder 1, %s15
    %p225 = scmp.lt.s32.totalorder %s15, 3
    %p226 = pnand %p224, %p225
    %p227 = pneg %p226
    // Predicated region
    $region9: #{_forward.1} parent=5 // pred_check
      _
    $region10: #{_forward.1} parent=5 // pred_check_branch
      %229 = sbr.rel (%p226) target = $region12
    $region11: #{_forward.1} parent=5 // pred_region
      %s230 = ssub.s32 %s15, 1
      // Predicated region
      $region13: #{_forward.1} parent=11 // pred_check
        %p231 = pneg %p104
      $region14: #{_forward.1} parent=11 // pred_check_branch
        %233 = sbr.rel (%p231) target = $region16
      $region15: #{_forward.1} parent=11 // pred_region
        _
      $region16: #{_forward.1} parent=11 // pred_fallthru
        _
      // Predicated region
      $region17: #{_forward.1} parent=11 // pred_check
        %p234 = pneg %p125
      $region18: #{_forward.1} parent=11 // pred_check_branch
        %236 = sbr.rel (%p234) target = $region20
      $region19: #{_forward.1} parent=11 // pred_region
        _
      $region20: #{_forward.1} parent=11 // pred_fallthru
        _
      // Predicated region
      $region21: #{_forward.1} parent=11 // pred_check
        %p237 = pneg %p146
      $region22: #{_forward.1} parent=11 // pred_check_branch
        %239 = sbr.rel (%p237) target = $region24
      $region23: #{_forward.1} parent=11 // pred_region
        _
      $region24: #{_forward.1} parent=11 // pred_fallthru
        _
      // Predicated region
      $region25: #{_forward.1} parent=11 // pred_check
        %p240 = pneg %p167
      $region26: #{_forward.1} parent=11 // pred_check_branch
        %242 = sbr.rel (%p240) target = $region28
      $region27: #{_forward.1} parent=11 // pred_region
        _
      $region28: #{_forward.1} parent=11 // pred_fallthru
        _
      // Predicated region
      $region29: #{_forward.1} parent=11 // pred_check
        %p243 = pneg %p188
      $region30: #{_forward.1} parent=11 // pred_check_branch
        %245 = sbr.rel (%p243) target = $region32
      $region31: #{_forward.1} parent=11 // pred_region
        _
      $region32: #{_forward.1} parent=11 // pred_fallthru
        _
    $region12: #{_forward.1} parent=5 // pred_fallthru
      _
    %p246 = scmp.lt.s32.totalorder %s15, 2
    // Predicated region
    $region33: #{_forward.1} parent=5 // pred_check
      %p247 = pneg %p246
    $region34: #{_forward.1} parent=5 // pred_check_branch
      %249 = sbr.rel (%p247) target = $region36
    $region35: #{_forward.1} parent=5 // pred_region
      // Predicated region
      $region37: #{_forward.1} parent=35 // pred_check
        %p250 = pneg %p49
      $region38: #{_forward.1} parent=35 // pred_check_branch
        %252 = sbr.rel (%p250) target = $region40
      $region39: #{_forward.1} parent=35 // pred_region
        %s253 = smul.u32 4, %s23
        %p254 = scmp.lt.s32.totalorder %s22, 1
        %s255 = scalar_select %p254, %s22, 1
        %p256 = scmp.lt.s32.totalorder %s253, 3
        %s257 = scalar_select %p256, %s253, 3
        %s258 = smul.addr %s255, 4
        %s259 = sadd.s32 %s257, %s258
        %s260 = smul.addr %s259, 4
        %s261 = scalar_lea.vmem %s0, %s260
        %s262 = smul.u32 4, %s23
      $region40: #{_forward.1} parent=35 // pred_fallthru
        _
      // Predicated region
      $region41: #{_forward.1} parent=35 // pred_check
        %p263 = pneg %p77
      $region42: #{_forward.1} parent=35 // pred_check_branch
        %265 = sbr.rel (%p263) target = $region44
      $region43: #{_forward.1} parent=35 // pred_region
        %s266 = smul.u32 4, %s23
        %p267 = scmp.lt.s32.totalorder %s22, 1
        %s268 = scalar_select %p267, %s22, 1
        %p269 = scmp.lt.s32.totalorder %s266, 3
        %s270 = scalar_select %p269, %s266, 3
        %s271 = smul.addr %s268, 4
        %s272 = sadd.s32 %s270, %s271
        %s273 = smul.addr %s272, 4
        %s274 = scalar_lea.vmem %s1, %s273
        %s275 = smul.u32 4, %s23
      $region44: #{_forward.1} parent=35 // pred_fallthru
        _
    $region36: #{_forward.1} parent=5 // pred_fallthru
      _
    %p276 = scmp.le.s32.totalorder 1, %s15
    %p277 = scmp.lt.s32.totalorder %s15, 3
    %p278 = pnand %p276, %p277
    %p279 = pneg %p278
    // Predicated region
    $region45: #{_forward.1} parent=5 // pred_check
      _
    $region46: #{_forward.1} parent=5 // pred_check_branch
      %281 = sbr.rel (%p278) target = $region48
    $region47: #{_forward.1} parent=5 // pred_region
      %s282 = ssub.s32 %s15, 1
      %s283 = smul.u32 4, %s25
      %p284 = scmp.lt.s32.totalorder %s24, 1
      %s285 = scalar_select %p284, %s24, 1
      %p286 = scmp.lt.s32.totalorder %s283, 3
      %s287 = scalar_select %p286, %s283, 3
      %s288 = smul.addr %s285, 4
      %s289 = sadd.s32 %s287, %s288
      %s290 = smul.addr %s289, 4
      %s291 = scalar_lea.vmem %s0, %s290
      %p292 = pneg %p55
      %p293 = pneg %p52
      %s294 = smul.u32 4, %s25
      %p295 = scmp.lt.s32.totalorder %s24, 1
      %s296 = scalar_select %p295, %s24, 1
      %p297 = scmp.lt.s32.totalorder %s294, 3
      %s298 = scalar_select %p297, %s294, 3
      %s299 = smul.addr %s296, 4
      %s300 = sadd.s32 %s298, %s299
      %s301 = smul.addr %s300, 4
      %s302 = scalar_lea.vmem %s1, %s301
      %p303 = pneg %p83
      %p304 = pneg %p80
      %p305 = pneg %p104
      %p306 = pneg %p101
      %p307 = pneg %p125
      %p308 = pneg %p122
      %p309 = pneg %p146
      %p310 = pneg %p143
      %p311 = pneg %p167
      %p312 = pneg %p164
      %p313 = pneg %p188
      %p314 = pneg %p185
      %p315 = pneg %p216
      %p316 = pneg %p213
      %s317 = smul.u32 4, %s25
      %p318 = scmp.lt.s32.totalorder %s24, 1
      %s319 = scalar_select %p318, %s24, 1
      %p320 = scmp.lt.s32.totalorder %s317, 3
      %s321 = scalar_select %p320, %s317, 3
      %s322 = smul.addr %s319, 4
      %s323 = sadd.s32 %s321, %s322
      %s324 = smul.addr %s323, 4
      %s325 = scalar_lea.vmem %s7, %s324
      %s326 = smul.u32 4, %s25
      %p327 = scmp.lt.s32.totalorder %s24, 1
      %s328 = scalar_select %p327, %s24, 1
      %p329 = scmp.lt.s32.totalorder %s326, 3
      %s330 = scalar_select %p329, %s326, 3
      %s331 = smul.addr %s328, 4
      %s332 = sadd.s32 %s330, %s331
      %s333 = smul.addr %s332, 4
      %s334 = scalar_lea.vmem %s0, %s333
      %s335 = smul.u32 4, %s25
      %s336 = smul.u32 4, %s25
      %p337 = scmp.lt.s32.totalorder %s24, 1
      %s338 = scalar_select %p337, %s24, 1
      %p339 = scmp.lt.s32.totalorder %s336, 3
      %s340 = scalar_select %p339, %s336, 3
      %s341 = smul.addr %s338, 4
      %s342 = sadd.s32 %s340, %s341
      %s343 = smul.addr %s342, 4
      %s344 = scalar_lea.vmem %s1, %s343
      %s345 = smul.u32 4, %s25
      %s346 = smul.u32 4, %s25
      %p347 = scmp.lt.s32.totalorder %s24, 1
      %s348 = scalar_select %p347, %s24, 1
      %p349 = scmp.lt.s32.totalorder %s346, 3
      %s350 = scalar_select %p349, %s346, 3
      %s351 = smul.addr %s348, 4
      %s352 = sadd.s32 %s350, %s351
      %s353 = smul.addr %s352, 4
      %s354 = scalar_lea.vmem %s7, %s353
      %s355 = smul.u32 4, %s25
      %v356 = vld [vmem:[%s334] sm:$0xff]
      %v357 = vld [vmem:[%s334 + $0x8] sm:$0xff]
      %v358 = vld [vmem:[%s344] sm:$0xff]
      %v359 = vld [vmem:[%s344 + $0x8] sm:$0xff]
      %v360 = vld [vmem:[%s2] sm:$0xff]
      %v361 = vld [vmem:[%s3] sm:$0xff]
      %363 = vset.pattern.permute.xlu0 0
      %364 = vperm.xlu0 %363, %v360
      %v365 = vpop.permute.xlu0 %364
      %v369 = vperm.slane %v356, 0
      %v370 = vperm.slane %v356, 4
      %v371 = vperm.slane %v357, 0
      %v372 = vperm.slane %v357, 4
      %v377 = vperm.slane %v369, 0
      %v378 = vperm.slane %v370, 0
      %v379 = vperm.slane %v371, 0
      %v380 = vperm.slane %v372, 0
      %v381 = vmul.f32 %v365, %v377
      %v382 = vmul.f32 %v365, %v378
      %v383 = vmul.f32 %v365, %v379
      %v384 = vmul.f32 %v365, %v380
      %385 = vset.pattern.permute.xlu0 1
      %386 = vperm.xlu0 %385, %v360
      %v387 = vpop.permute.xlu0 %386
      %v389 = vperm.slane %v356, 1
      %v390 = vperm.slane %v356, 5
      %v391 = vperm.slane %v357, 1
      %v392 = vperm.slane %v357, 5
      %v397 = vperm.slane %v389, 1
      %v398 = vperm.slane %v390, 1
      %v399 = vperm.slane %v391, 1
      %v400 = vperm.slane %v392, 1
      %v401 = vmul.f32 %v387, %v397
      %v402 = vmul.f32 %v387, %v398
      %v403 = vmul.f32 %v387, %v399
      %v404 = vmul.f32 %v387, %v400
      %v405 = vadd.f32 %v381, %v401
      %v406 = vadd.f32 %v382, %v402
      %v407 = vadd.f32 %v383, %v403
      %v408 = vadd.f32 %v384, %v404
      %409 = vset.pattern.permute.xlu0 2
      %410 = vperm.xlu0 %409, %v360
      %v411 = vpop.permute.xlu0 %410
      %v413 = vperm.slane %v356, 2
      %v414 = vperm.slane %v356, 6
      %v415 = vperm.slane %v357, 2
      %v416 = vperm.slane %v357, 6
      %v421 = vperm.slane %v413, 2
      %v422 = vperm.slane %v414, 2
      %v423 = vperm.slane %v415, 2
      %v424 = vperm.slane %v416, 2
      %v425 = vmul.f32 %v411, %v421
      %v426 = vmul.f32 %v411, %v422
      %v427 = vmul.f32 %v411, %v423
      %v428 = vmul.f32 %v411, %v424
      %v429 = vadd.f32 %v405, %v425
      %v430 = vadd.f32 %v406, %v426
      %v431 = vadd.f32 %v407, %v427
      %v432 = vadd.f32 %v408, %v428
      %433 = vset.pattern.permute.xlu0 3
      %434 = vperm.xlu0 %433, %v360
      %v435 = vpop.permute.xlu0 %434
      %v437 = vperm.slane %v356, 3
      %v438 = vperm.slane %v356, 7
      %v439 = vperm.slane %v357, 3
      %v440 = vperm.slane %v357, 7
      %v445 = vperm.slane %v437, 3
      %v446 = vperm.slane %v438, 3
      %v447 = vperm.slane %v439, 3
      %v448 = vperm.slane %v440, 3
      %v449 = vmul.f32 %v435, %v445
      %v450 = vmul.f32 %v435, %v446
      %v451 = vmul.f32 %v435, %v447
      %v452 = vmul.f32 %v435, %v448
      %v453 = vadd.f32 %v429, %v449
      %v454 = vadd.f32 %v430, %v450
      %v455 = vadd.f32 %v431, %v451
      %v456 = vadd.f32 %v432, %v452
      %458 = vset.pattern.permute.xlu0 0
      %459 = vperm.xlu0 %458, %v361
      %v460 = vpop.permute.xlu0 %459
      %v464 = vperm.slane %v358, 0
      %v465 = vperm.slane %v358, 4
      %v466 = vperm.slane %v359, 0
      %v467 = vperm.slane %v359, 4
      %v472 = vperm.slane %v464, 0
      %v473 = vperm.slane %v465, 0
      %v474 = vperm.slane %v466, 0
      %v475 = vperm.slane %v467, 0
      %v476 = vmul.f32 %v460, %v472
      %v477 = vmul.f32 %v460, %v473
      %v478 = vmul.f32 %v460, %v474
      %v479 = vmul.f32 %v460, %v475
      %480 = vset.pattern.permute.xlu0 1
      %481 = vperm.xlu0 %480, %v361
      %v482 = vpop.permute.xlu0 %481
      %v484 = vperm.slane %v358, 1
      %v485 = vperm.slane %v358, 5
      %v486 = vperm.slane %v359, 1
      %v487 = vperm.slane %v359, 5
      %v492 = vperm.slane %v484, 1
      %v493 = vperm.slane %v485, 1
      %v494 = vperm.slane %v486, 1
      %v495 = vperm.slane %v487, 1
      %v496 = vmul.f32 %v482, %v492
      %v497 = vmul.f32 %v482, %v493
      %v498 = vmul.f32 %v482, %v494
      %v499 = vmul.f32 %v482, %v495
      %v500 = vadd.f32 %v476, %v496
      %v501 = vadd.f32 %v477, %v497
      %v502 = vadd.f32 %v478, %v498
      %v503 = vadd.f32 %v479, %v499
      %504 = vset.pattern.permute.xlu0 2
      %505 = vperm.xlu0 %504, %v361
      %v506 = vpop.permute.xlu0 %505
      %v508 = vperm.slane %v358, 2
      %v509 = vperm.slane %v358, 6
      %v510 = vperm.slane %v359, 2
      %v511 = vperm.slane %v359, 6
      %v516 = vperm.slane %v508, 2
      %v517 = vperm.slane %v509, 2
      %v518 = vperm.slane %v510, 2
      %v519 = vperm.slane %v511, 2
      %v520 = vmul.f32 %v506, %v516
      %v521 = vmul.f32 %v506, %v517
      %v522 = vmul.f32 %v506, %v518
      %v523 = vmul.f32 %v506, %v519
      %v524 = vadd.f32 %v500, %v520
      %v525 = vadd.f32 %v501, %v521
      %v526 = vadd.f32 %v502, %v522
      %v527 = vadd.f32 %v503, %v523
      %528 = vset.pattern.permute.xlu0 3
      %529 = vperm.xlu0 %528, %v361
      %v530 = vpop.permute.xlu0 %529
      %v532 = vperm.slane %v358, 3
      %v533 = vperm.slane %v358, 7
      %v534 = vperm.slane %v359, 3
      %v535 = vperm.slane %v359, 7
      %v540 = vperm.slane %v532, 3
      %v541 = vperm.slane %v533, 3
      %v542 = vperm.slane %v534, 3
      %v543 = vperm.slane %v535, 3
      %v544 = vmul.f32 %v530, %v540
      %v545 = vmul.f32 %v530, %v541
      %v546 = vmul.f32 %v530, %v542
      %v547 = vmul.f32 %v530, %v543
      %v548 = vadd.f32 %v524, %v544
      %v549 = vadd.f32 %v525, %v545
      %v550 = vadd.f32 %v526, %v546
      %v551 = vadd.f32 %v527, %v547
      %v552 = vadd.f32 %v453, %v548
      %v553 = vadd.f32 %v454, %v549
      %v554 = vadd.f32 %v455, %v550
      %v555 = vadd.f32 %v456, %v551
      %v556 = vld [vmem:[%s4] sm:$0xff]
      %558 = vset.pattern.permute.xlu0 0
      %559 = vperm.xlu0 %558, %v556
      %v560 = vpop.permute.xlu0 %559
      %v562 = vadd.f32 %v552, %v560
      %v563 = vadd.f32 %v553, %v560
      %v564 = vadd.f32 %v554, %v560
      %v565 = vadd.f32 %v555, %v560
      %v566 = vmax.f32 %v562, 0.0
      %v567 = vmax.f32 %v563, 0.0
      %v568 = vmax.f32 %v564, 0.0
      %v569 = vmax.f32 %v565, 0.0
      %v570 = vld [vmem:[%s5] sm:$0xff]
      %572 = vset.pattern.permute.xlu0 0
      %573 = vperm.xlu0 %572, %v570
      %v574 = vpop.permute.xlu0 %573
      %v576 = vmul.f32 %v574, %v566
      %v577 = vmul.f32 %v574, %v567
      %v578 = vmul.f32 %v574, %v568
      %v579 = vmul.f32 %v574, %v569
      %v580 = vrot.slane %v576, 4
      %v581 = vadd.f32 %v576, %v580
      %v582 = vrot.slane %v581, 2
      %v583 = vadd.f32 %v581, %v582
      %v584 = vrot.slane %v583, 1
      %v585 = vadd.f32 %v583, %v584
      %v586 = vrot.slane %v577, 4
      %v587 = vadd.f32 %v577, %v586
      %v588 = vrot.slane %v587, 2
      %v589 = vadd.f32 %v587, %v588
      %v590 = vrot.slane %v589, 1
      %v591 = vadd.f32 %v589, %v590
      %v592 = vrot.slane %v578, 4
      %v593 = vadd.f32 %v578, %v592
      %v594 = vrot.slane %v593, 2
      %v595 = vadd.f32 %v593, %v594
      %v596 = vrot.slane %v595, 1
      %v597 = vadd.f32 %v595, %v596
      %v598 = vrot.slane %v579, 4
      %v599 = vadd.f32 %v579, %v598
      %v600 = vrot.slane %v599, 2
      %v601 = vadd.f32 %v599, %v600
      %v602 = vrot.slane %v601, 1
      %v603 = vadd.f32 %v601, %v602
      %v604 = vld [vmem:[#allocation2] sm:$0x1]
      %606 = vset.pattern.permute.xlu0 0
      %607 = vperm.xlu0 %606, %v604
      %v608 = vpop.permute.xlu0 %607
      %v610 = vperm.slane %v608, 0
      %v611 = vadd.f32 %v585, %v610
      %v612 = vadd.f32 %v591, %v610
      %v613 = vadd.f32 %v597, %v610
      %v614 = vadd.f32 %v603, %v610
      %v615 = vxor.u32 %v611, 2147483648
      %v616 = vxor.u32 %v612, 2147483648
      %v617 = vxor.u32 %v613, 2147483648
      %v618 = vxor.u32 %v614, 2147483648
      %v619 = vmul.f32 %v615, 1.442695
      %v620 = vpow.pop %v619
      %v621 = vmul.f32 %v616, 1.442695
      %v622 = vpow.pop %v621
      %v623 = vmul.f32 %v617, 1.442695
      %v624 = vpow.pop %v623
      %v625 = vmul.f32 %v618, 1.442695
      %v626 = vpow.pop %v625
      %v627 = vadd.f32 %v620, 1.0
      %v628 = vadd.f32 %v622, 1.0
      %v629 = vadd.f32 %v624, 1.0
      %v630 = vadd.f32 %v626, 1.0
      %v631 = vrcp.pop %v627
      %v632 = vmul.f32 %v627, %v631
      %v633 = vsub.f32 1.0, %v632
      %v634 = vmul.f32 %v631, %v633
      %v635 = vadd.f32 %v631, %v634
      %vm636 = vweird.f32 %v627
      %vm637 = vweird.f32 %v631
      %vm638 = vmor %vm636, %vm637
      %v639 = vsel %vm638, %v631, %v635
      %v640 = vand.u32 2147483647, %v627
      %vm641 = vcmp.eq.f32.partialorder %v640, 8.507059e+37
      %v642 = vand.u32 %v627, 2147483648
      %v643 = vor.u32 1.1754944e-38, %v642
      %v644 = vsel %vm641, %v643, %v639
      %v645 = vmul.f32 1.0, %v644
      %v646 = vrcp.pop %v628
      %v647 = vmul.f32 %v628, %v646
      %v648 = vsub.f32 1.0, %v647
      %v649 = vmul.f32 %v646, %v648
      %v650 = vadd.f32 %v646, %v649
      %vm651 = vweird.f32 %v628
      %vm652 = vweird.f32 %v646
      %vm653 = vmor %vm651, %vm652
      %v654 = vsel %vm653, %v646, %v650
      %v655 = vand.u32 2147483647, %v628
      %vm656 = vcmp.eq.f32.partialorder %v655, 8.507059e+37
      %v657 = vand.u32 %v628, 2147483648
      %v658 = vor.u32 1.1754944e-38, %v657
      %v659 = vsel %vm656, %v658, %v654
      %v660 = vmul.f32 1.0, %v659
      %v661 = vrcp.pop %v629
      %v662 = vmul.f32 %v629, %v661
      %v663 = vsub.f32 1.0, %v662
      %v664 = vmul.f32 %v661, %v663
      %v665 = vadd.f32 %v661, %v664
      %vm666 = vweird.f32 %v629
      %vm667 = vweird.f32 %v661
      %vm668 = vmor %vm666, %vm667
      %v669 = vsel %vm668, %v661, %v665
      %v670 = vand.u32 2147483647, %v629
      %vm671 = vcmp.eq.f32.partialorder %v670, 8.507059e+37
      %v672 = vand.u32 %v629, 2147483648
      %v673 = vor.u32 1.1754944e-38, %v672
      %v674 = vsel %vm671, %v673, %v669
      %v675 = vmul.f32 1.0, %v674
      %v676 = vrcp.pop %v630
      %v677 = vmul.f32 %v630, %v676
      %v678 = vsub.f32 1.0, %v677
      %v679 = vmul.f32 %v676, %v678
      %v680 = vadd.f32 %v676, %v679
      %vm681 = vweird.f32 %v630
      %vm682 = vweird.f32 %v676
      %vm683 = vmor %vm681, %vm682
      %v684 = vsel %vm683, %v676, %v680
      %v685 = vand.u32 2147483647, %v630
      %vm686 = vcmp.eq.f32.partialorder %v685, 8.507059e+37
      %v687 = vand.u32 %v630, 2147483648
      %v688 = vor.u32 1.1754944e-38, %v687
      %v689 = vsel %vm686, %v688, %v684
      %v690 = vmul.f32 1.0, %v689
      %v695 = vrot.slane %v660, 4
      %v696 = vrot.slane %v690, 4
      %vm697 = vcmask 1043456
      %v698 = vsel %vm697, %v645, %v695
      %v699 = vsel %vm697, %v675, %v696
      %v702 = vmul.f32 %v358, %v698
      %v703 = vmul.f32 %v359, %v699
      %704 = vst [vmem:[%s354] sm:$0xff] %v702
      %705 = vst [vmem:[%s354 + $0x8] sm:$0xff] %v703
      %s706 = smul.u32 4, %s25
      %p707 = scmp.lt.s32.totalorder %s24, 1
      %s708 = scalar_select %p707, %s24, 1
      %p709 = scmp.lt.s32.totalorder %s706, 3
      %s710 = scalar_select %p709, %s706, 3
      %s711 = smul.addr %s708, 4
      %s712 = sadd.s32 %s710, %s711
      %s713 = smul.addr %s712, 4
      %s714 = scalar_lea.vmem %s7, %s713
      // Predicated region
      $region49: #{_forward.1} parent=47 // pred_check
        %p715 = pneg %p213
      $region50: #{_forward.1} parent=47 // pred_check_branch
        %717 = sbr.rel (%p715) target = $region52
      $region51: #{_forward.1} parent=47 // pred_region
        %s718 = smul.u32 4, %s25
      $region52: #{_forward.1} parent=47 // pred_fallthru
        _
    $region48: #{_forward.1} parent=5 // pred_fallthru
      _
    %p719 = scmp.le.s32.totalorder 2, %s15
    // Predicated region
    $region53: #{_forward.1} parent=5 // pred_check
      %p720 = pneg %p719
    $region54: #{_forward.1} parent=5 // pred_check_branch
      %722 = sbr.rel (%p720) target = $region56
    $region55: #{_forward.1} parent=5 // pred_region
      %s723 = ssub.s32 %s15, 2
      // Predicated region
      $region57: #{_forward.1} parent=55 // pred_check
        %p724 = pneg %p219
      $region58: #{_forward.1} parent=55 // pred_check_branch
        %726 = sbr.rel (%p724) target = $region60
      $region59: #{_forward.1} parent=55 // pred_region
        %s727 = smul.u32 4, %s27
        %p728 = scmp.lt.s32.totalorder %s26, 1
        %s729 = scalar_select %p728, %s26, 1
        %p730 = scmp.lt.s32.totalorder %s727, 3
        %s731 = scalar_select %p730, %s727, 3
        %s732 = smul.addr %s729, 4
        %s733 = sadd.s32 %s731, %s732
        %s734 = smul.addr %s733, 4
        %s735 = scalar_lea.vmem %s7, %s734
      $region60: #{_forward.1} parent=55 // pred_fallthru
        _
    $region56: #{_forward.1} parent=5 // pred_fallthru
      _
  $region6: #{_forward.1} parent=0 // loop_footer
    %s19 = sadd.s32 1, %s15
  $region7: #{_forward.1} parent=0 // loop_footer_branch
    %14 = sbr.rel target = $region3
  $region8: #{_forward.1} parent=0 // loop_exit
    _

</llo_original>
